<compile_context>
chip_gen: v7x
topology: tpu7x:2x2x1
jax: 0.10.0
libtpu: 0.0.40
codegen_flags: <defaults>
</compile_context>

<pallas_src>
import math

import jax
import jax.numpy as jnp
from jax.experimental import pallas as pl
from jax.experimental.pallas import tpu as pltpu

_NEG_INF = -1e30  # bias fill for padded vocab lanes -> softmax prob exactly 0


def _round_up(a, m):
    return (a + m - 1) // m * m


def _generator_kernel(x_ref, w_ref, b_ref, o_ref):
    # Grid = (M tiles [parallel], V tiles [arbitrary, streamed]).
    #   x_ref: (bm, D)  bf16   w_ref: (D, tv) bf16   b_ref: (1, tv) f32
    #   o_ref: (bm, Vp) f32 -- resident across the V axis; logits are staged
    #   into it per V tile, softmax is applied at the last V step.
    j = pl.program_id(1)
    tv = w_ref.shape[1]

    logits = jnp.dot(x_ref[...], w_ref[...], preferred_element_type=jnp.float32)
    logits = logits + b_ref[...]

    col0 = pl.multiple_of(j * tv, 128)
    o_ref[:, pl.ds(col0, tv)] = logits

    @pl.when(j == pl.num_programs(1) - 1)
    def _():
        full = o_ref[...]
        m = jnp.max(full, axis=-1, keepdims=True)
        e = jnp.exp(full - m)
        denom = jnp.sum(e, axis=-1, keepdims=True)
        o_ref[...] = (e * pl.reciprocal(denom, approx=True)).astype(o_ref.dtype)


def generator_forward(x, w, b, *, block_m=256, block_v=2048):
    """x: [B, D], w: [D, V] (= W_pytorch.T), b: [1, V] -> softmax(x @ w + b): [B, V]."""
    B, D = x.shape
    Dw, V = w.shape
    assert D == Dw and b.shape == (1, V)

    # ---- tile sizing -------------------------------------------------------
    # Vocab tile: lane-dense (multiple of 128); padded vocab is a multiple of it
    # so the resident output row is never sliced out of bounds.
    block_v = min(_round_up(block_v, 128), _round_up(V, 128))
    Vp = _round_up(V, block_v)

    # Row tile: multiple of 8, capped at the (padded) batch.
    block_m = min(_round_up(block_m, 8), _round_up(B, 8))
    Bp = _round_up(B, block_m)
    # Keep >=2 M tiles when possible so v7x's second TensorCore gets work
    # (the M grid axis is marked "parallel"); v5e/v6e are unaffected.
    if Bp == block_m and B > 8:
        block_m = _round_up(pl.cdiv(block_m, 2), 8)
        Bp = _round_up(B, block_m)

    grid = (Bp // block_m, Vp // block_v)

    # ---- pad + cast inputs (bf16 halves weight HBM/VMEM traffic; f32 accum) --
    x_p = jnp.zeros((Bp, D), jnp.bfloat16).at[:B, :].set(x.astype(jnp.bfloat16))
    w_p = jnp.zeros((D, Vp), jnp.bfloat16).at[:, :V].set(w.astype(jnp.bfloat16))
    b_p = jnp.full((1, Vp), _NEG_INF, jnp.float32).at[:, :V].set(b.astype(jnp.float32))

    # ---- VMEM budget: double-buffered x/w/bias tiles + resident output row --
    vmem_need = (
        2 * block_m * D * 2        # x tile (bf16), double-buffered
        + 2 * D * block_v * 2      # weight tile (bf16), double-buffered
        + 2 * block_v * 4          # bias tile (f32), double-buffered
        + block_m * Vp * 4         # resident (block_m, Vp) output row (f32)
    )
    vmem_limit = int(min(max(2 * vmem_need, 32 << 20), 64 << 20))

    cost = pl.CostEstimate(
        flops=2 * Bp * D * Vp,
        transcendentals=Bp * Vp,
        bytes_accessed=(
            Bp * D * 2                 # x (bf16)
            + grid[0] * D * Vp * 2     # weight streamed once per M tile (bf16)
            + grid[0] * Vp * 4         # bias per M tile (f32)
            + Bp * Vp * 4              # probabilities out (f32)
        ),
    )

    out = pl.pallas_call(
        _generator_kernel,
        out_shape=jax.ShapeDtypeStruct((Bp, Vp), jnp.float32),
        grid_spec=pltpu.PrefetchScalarGridSpec(
            num_scalar_prefetch=0,
            grid=grid,
            in_specs=[
                pl.BlockSpec((block_m, D), lambda i, j: (i, 0)),  # x rows (resident over j)
                pl.BlockSpec((D, block_v), lambda i, j: (0, j)),  # streamed weight tile
                pl.BlockSpec((1, block_v), lambda i, j: (0, j)),  # bias tile
            ],
            out_specs=pl.BlockSpec((block_m, Vp), lambda i, j: (i, 0)),  # resident prob row
        ),
        compiler_params=pltpu.CompilerParams(
            dimension_semantics=("parallel", "arbitrary"),
            vmem_limit_bytes=vmem_limit,
        ),
        cost_estimate=cost,
    )(x_p, w_p, b_p)

    return out[:B, :V]


def reference_forward(x, w, b):
    logits = x @ w + b
    return jax.nn.softmax(logits, axis=-1)


def _make_inputs(key, batch, model_dim, vocab_size):
    kx, kw, kb = jax.random.split(key, 3)
    # nn.Linear-style init: U(-1/sqrt(in_features), 1/sqrt(in_features))
    bound = 1.0 / math.sqrt(model_dim)
    w = jax.random.uniform(kw, (model_dim, vocab_size), jnp.float32, -bound, bound)
    b = jax.random.uniform(kb, (1, vocab_size), jnp.float32, -bound, bound)
    x = jax.random.normal(kx, (batch, model_dim), jnp.float32)
    return x, w, b


if __name__ == "__main__":
    key = jax.random.PRNGKey(0)
    k1, k2 = jax.random.split(key)

    # --- small, aligned case (matches the module's toy sizes) ---------------
    model_dim, vocab_size, batch = 32, 128, 8
    x, w, b = _make_inputs(k1, batch, model_dim, vocab_size)
    out = jax.block_until_ready(generator_forward(x, w, b))
    ref = reference_forward(x, w, b)
    assert out.shape == (batch, vocab_size)
    assert jnp.allclose(jnp.sum(out, axis=-1), 1.0, atol=5e-3)
    assert jnp.allclose(out, ref, atol=2e-3, rtol=2e-2)

    # --- ragged case exercises B/V padding + the multi-V-tile streamed path --
    batch2, vocab2 = 6, 200
    x2, w2, b2 = _make_inputs(k2, batch2, model_dim, vocab2)
    out2 = jax.block_until_ready(generator_forward(x2, w2, b2, block_v=128))
    ref2 = reference_forward(x2, w2, b2)
    assert out2.shape == (batch2, vocab2)
    assert jnp.allclose(jnp.sum(out2, axis=-1), 1.0, atol=5e-3)
    assert jnp.allclose(out2, ref2, atol=2e-3, rtol=2e-2)

    print("KERNEL_OK")
</pallas_src>

<mosaic_0001>
module attributes {stable_mosaic.version = 11 : i64} {
  func.func @_generator_kernel(%arg0: i32, %arg1: i32, %arg2: memref<8x32xbf16, #tpu.memory_space<vmem>>, %arg3: memref<32x128xbf16, #tpu.memory_space<vmem>>, %arg4: memref<1x128xf32, #tpu.memory_space<vmem>>, %arg5: memref<8x128xf32, #tpu.memory_space<vmem>>) attributes {dimension_semantics = [#tpu.dimension_semantics<parallel>, #tpu.dimension_semantics<arbitrary>], iteration_bounds = array<i64: 1, 1>, scalar_prefetch = 0 : i64, scratch_operands = 0 : i64, tpu.core_type = #tpu.core_type<tc>, window_params = [{transform_indices = @transform_0, window_bounds = array<i64: 8, 32>}, {transform_indices = @transform_1, window_bounds = array<i64: 32, 128>}, {transform_indices = @transform_2, window_bounds = array<i64: 1, 128>}, {transform_indices = @transform_3, window_bounds = array<i64: 8, 128>}]} {
    %c0 = arith.constant 0 : index
    %c0_0 = arith.constant 0 : index
    %0 = vector.load %arg2[%c0, %c0_0] : memref<8x32xbf16, #tpu.memory_space<vmem>>, vector<8x32xbf16>
    %c0_1 = arith.constant 0 : index
    %c0_2 = arith.constant 0 : index
    %1 = vector.load %arg3[%c0_1, %c0_2] : memref<32x128xbf16, #tpu.memory_space<vmem>>, vector<32x128xbf16>
    %cst = arith.constant dense<0.000000e+00> : vector<8x128xf32>
    %2 = tpu.matmul %0, %1, %cst {dimension_numbers = #tpu.dot_dimension_numbers<[1], [0], [0], [1], [0, 0, 1, 1], [], []>} : vector<8x32xbf16>, vector<32x128xbf16>, vector<8x128xf32> -> vector<8x128xf32>
    %c0_3 = arith.constant 0 : index
    %c0_4 = arith.constant 0 : index
    %3 = vector.load %arg4[%c0_3, %c0_4] : memref<1x128xf32, #tpu.memory_space<vmem>>, vector<1x128xf32>
    %4 = vector.broadcast %3 : vector<1x128xf32> to vector<8x128xf32>
    %5 = arith.addf %2, %4 : vector<8x128xf32>
    %c128_i32 = arith.constant 128 : i32
    %6 = arith.muli %arg1, %c128_i32 : i32
    %7 = tpu.assume_multiple %6, 128 : i32
    %c0_5 = arith.constant 0 : index
    %8 = arith.index_cast %7 : i32 to index
    %9 = vector.load %arg5[%c0_5, %8] : memref<8x128xf32, #tpu.memory_space<vmem>>, vector<8x128xf32>
    tpu.vector_store %arg5[%c0_5, %8], %5 {strides = array<i32>} : memref<8x128xf32, #tpu.memory_space<vmem>>, vector<8x128xf32>,
    %c0_i32 = arith.constant 0 : i32
    %10 = arith.cmpi eq, %arg1, %c0_i32 : i32
    %11 = arith.extui %10 : i1 to i32
    %c0_i32_6 = arith.constant 0 : i32
    %12 = arith.cmpi ne, %11, %c0_i32_6 : i32
    scf.if %12 {
      %c0_7 = arith.constant 0 : index
      %c0_8 = arith.constant 0 : index
      %13 = vector.load %arg5[%c0_7, %c0_8] : memref<8x128xf32, #tpu.memory_space<vmem>>, vector<8x128xf32>
      %cst_9 = arith.constant dense<0xFF800000> : vector<8xf32>
      %14 = vector.multi_reduction <maximumf>, %13, %cst_9 [1] : vector<8x128xf32> to vector<8xf32>
      %15 = vector.shape_cast %14 : vector<8xf32> to vector<8x1xf32>
      %16 = vector.broadcast %15 : vector<8x1xf32> to vector<8x128xf32>
      %17 = arith.subf %13, %16 : vector<8x128xf32>
      %18 = math.exp %17 : vector<8x128xf32>
      %cst_10 = arith.constant dense<0.000000e+00> : vector<8xf32>
      %19 = vector.multi_reduction <add>, %18, %cst_10 [1] : vector<8x128xf32> to vector<8xf32>
      %20 = vector.shape_cast %19 : vector<8xf32> to vector<8x1xf32>
      %21 = tpu.reciprocal %20 {approx = true} : vector<8x1xf32> -> vector<8x1xf32>
      %22 = vector.broadcast %21 : vector<8x1xf32> to vector<8x128xf32>
      %23 = arith.mulf %18, %22 : vector<8x128xf32>
      %c0_11 = arith.constant 0 : index
      %c0_12 = arith.constant 0 : index
      %24 = vector.load %arg5[%c0_11, %c0_12] : memref<8x128xf32, #tpu.memory_space<vmem>>, vector<8x128xf32>
      tpu.vector_store %arg5[%c0_11, %c0_12], %23 {strides = array<i32>} : memref<8x128xf32, #tpu.memory_space<vmem>>, vector<8x128xf32>,
    } else {
    }
    return
  }
  func.func @transform_0(%arg0: i32, %arg1: i32) -> (i32, i32) {
    %c0_i32 = arith.constant 0 : i32
    %c0_i32_0 = arith.constant 0 : i32
    return %arg0, %c0_i32 : i32, i32
  }
  func.func @transform_1(%arg0: i32, %arg1: i32) -> (i32, i32) {
    %c0_i32 = arith.constant 0 : i32
    %c0_i32_0 = arith.constant 0 : i32
    return %c0_i32, %arg1 : i32, i32
  }
  func.func @transform_2(%arg0: i32, %arg1: i32) -> (i32, i32) {
    %c0_i32 = arith.constant 0 : i32
    %c0_i32_0 = arith.constant 0 : i32
    return %c0_i32, %arg1 : i32, i32
  }
  func.func @transform_3(%arg0: i32, %arg1: i32) -> (i32, i32) {
    %c0_i32 = arith.constant 0 : i32
    %c0_i32_0 = arith.constant 0 : i32
    return %arg0, %c0_i32 : i32, i32
  }
}

</mosaic_0001>

<llo_original>
// kernel: tpu_custom_call.1
$region0: #{tpu_custom_call.1}
  #allocation0 [shape = 'u32[]', space=smem, size = 0x4, offset = 0x4, fixed_abs, tag = 'smem constant byte address 0x4 - core index']
  #allocation1 [shape = 'u32[144,128]{1,0:T(1,128)}', space=vmem, size = 0x12000, scoped, tag = 'internal scratch']
  %s0 = inlined_call_operand.hbm [shape: bf16[8,32], index: 0, kind: input, shape index: {}]
  %s1 = inlined_call_operand.hbm [shape: bf16[32,128], index: 1, kind: input, shape index: {}]
  %s2 = inlined_call_operand.vmem [shape: f32[1,128], index: 2, kind: input, shape index: {}]
  %s3 = inlined_call_operand.hbm [shape: f32[8,128], index: 3, kind: output, shape index: {}]
  %s4 = sld [smem:[#allocation0]]
  $region34: #{tpu_custom_call.1} parent=0
    _
  %s6 = ssub.s32 1, %s4
  %s7 = scalar_select 0, %s6, %s4
  $region1: #{tpu_custom_call.1} parent=0
    #allocation2 [shape = 'u8[2048]{0}', space=vmem, size = 0x800, scoped, tag = 'input window, operand 0, single buffered']
    #allocation3 [shape = 's32[1]{0}', space=sflag, size = 0x4, scoped, tag = 'scoped memory for tpu_custom_call.1']
    #allocation4 [shape = 's32[1]{0}', space=sflag, size = 0x4, scoped, tag = 'scoped memory for tpu_custom_call.1']
    #allocation5 [shape = 'u8[8192]{0}', space=vmem, size = 0x2000, scoped, tag = 'input window, operand 1, single buffered']
    #allocation6 [shape = 's32[1]{0}', space=sflag, size = 0x4, scoped, tag = 'scoped memory for tpu_custom_call.1']
    #allocation7 [shape = 'u8[4096]{0}', space=vmem, size = 0x1000, scoped, tag = 'output window, operand 0, single buffered']
    %8 = vsyncpa [#allocation3], 0
    %9 = vsyncpa [#allocation6], 0
    %10 = vsyncpa [#allocation4], 0
    // Predicated region
    $region2: #{tpu_custom_call.1} parent=1 // pred_check
      _
    $region3: #{tpu_custom_call.1} parent=1 // pred_check_branch
      %12 = sbr.rel (0) target = $region5
    $region4: #{tpu_custom_call.1} parent=1 // pred_region
      %s14 = ssub.s32 64, 64
      %15 = vsyncadd [#allocation3], %s14
      %s17 = sshll.u32 [#allocation2], 4
      %s18 = int_to_ptr.vmem [resolvable:$true] %s17
      %20 = dma.hbm_to_vmem [thread:$0]  %s0, 64, %s18, [#allocation3]
    $region5: #{tpu_custom_call.1} parent=1 // pred_fallthru
      _
    // Predicated region
    $region6: #{tpu_custom_call.1} parent=1 // pred_check
      _
    $region7: #{tpu_custom_call.1} parent=1 // pred_check_branch
      %22 = sbr.rel (0) target = $region9
    $region8: #{tpu_custom_call.1} parent=1 // pred_region
      %s24 = ssub.s32 256, 256
      %25 = vsyncadd [#allocation6], %s24
      %s26 = sshll.u32 [#allocation5], 4
      %s27 = int_to_ptr.vmem [resolvable:$true] %s26
      %32 = dma.hbm_to_vmem [thread:$0]  %s1, 256, %s27, [#allocation6], 64, 64, 4
    $region9: #{tpu_custom_call.1} parent=1 // pred_fallthru
      _
    // Predicated region
    $region10: #{tpu_custom_call.1} parent=1 // pred_check
      _
    $region11: #{tpu_custom_call.1} parent=1 // pred_check_branch
      %34 = sbr.rel (0) target = $region13
    $region12: #{tpu_custom_call.1} parent=1 // pred_region
      _
    $region13: #{tpu_custom_call.1} parent=1 // pred_fallthru
      _
    // Predicated region
    $region14: #{tpu_custom_call.1} parent=1 // pred_check
      _
    $region15: #{tpu_custom_call.1} parent=1 // pred_check_branch
      %36 = sbr.rel (0) target = $region17
    $region16: #{tpu_custom_call.1} parent=1 // pred_region
      %37 = dma.done [#allocation3], 64
    $region17: #{tpu_custom_call.1} parent=1 // pred_fallthru
      _
    // Predicated region
    $region18: #{tpu_custom_call.1} parent=1 // pred_check
      _
    $region19: #{tpu_custom_call.1} parent=1 // pred_check_branch
      %39 = sbr.rel (0) target = $region21
    $region20: #{tpu_custom_call.1} parent=1 // pred_region
      %40 = dma.done [#allocation6], 256
    $region21: #{tpu_custom_call.1} parent=1 // pred_fallthru
      _
    %v42 = vld [vmem:[#allocation2] sm:$0xf]
    %v43 = vld [vmem:[#allocation5] sm:$0xf]
    %v44 = vld [vmem:[#allocation5 + $0x4] sm:$0xf]
    %v45 = vld [vmem:[#allocation5 + $0x8] sm:$0xf]
    %v46 = vld [vmem:[#allocation5 + $0xc] sm:$0xf]
    %v47 = vld [vmem:[%s2] sm:$0x1]
    %v49 = vlaneseq
    %v50 = vshrl.u32 %v49, 7
    %v51 = vsub.s32 0, %v50
    %v52 = vrot.slane %v47, %v51
    %v58 = vunpack.c.l.b16 %v43
    %v59 = vunpack.c.l.b16 %v44
    %v60 = vunpack.c.l.b16 %v45
    %v61 = vunpack.c.l.b16 %v46
    %v62 = vpack.c.b16 %v59, %v58
    %v63 = vpack.c.b16 %v61, %v60
    %vm66 = vcmask 261120
    %v68 = vsel %vm66, %v42, 0
    %70 = vmatprep.subr.bf16.mxu0 0
    %71 = vmatpush1.bf16.msra.mxu0 %v62
    %72 = vmatprep.subr.bf16.mxu0 0
    %73 = vmatpush1.bf16.msra.mxu0 %v63
    %74 = vmatprep.subr.bf16.mxu0 0
    %75 = vmatpush1.bf16.msra.mxu0 0
    %76 = vmatprep.subr.bf16.mxu0 0
    %77 = vmatpush1.bf16.msra.mxu0 0
    %78 = vmatprep.subr.bf16.mxu0 0
    %79 = vmatpush1.bf16.msra.mxu0 0
    %80 = vmatprep.subr.bf16.mxu0 0
    %81 = vmatpush1.bf16.msra.mxu0 0
    %82 = vmatprep.subr.bf16.mxu0 0
    %83 = vmatpush1.bf16.msra.mxu0 0
    %84 = vmatprep.subr.bf16.mxu0 0
    %85 = vmatpush1.bf16.msra.mxu0 0
    %86 = vmatprep.subr.bf16.mxu0 0
    %87 = vmatpush1.bf16.msra.mxu0 0
    %88 = vmatprep.subr.bf16.mxu0 0
    %89 = vmatpush1.bf16.msra.mxu0 0
    %90 = vmatprep.subr.bf16.mxu0 0
    %91 = vmatpush1.bf16.msra.mxu0 0
    %92 = vmatprep.subr.bf16.mxu0 0
    %93 = vmatpush1.bf16.msra.mxu0 0
    %94 = vmatprep.subr.bf16.mxu0 0
    %95 = vmatpush1.bf16.msra.mxu0 0
    %96 = vmatprep.subr.bf16.mxu0 0
    %97 = vmatpush1.bf16.msra.mxu0 0
    %98 = vmatprep.subr.bf16.mxu0 0
    %99 = vmatpush1.bf16.msra.mxu0 0
    %100 = vmatprep.subr.bf16.mxu0 0
    %101 = vmatpush1.bf16.msra.mxu0 0
    %102 = vmatprep.mubr.bf16.mxu0 0
    %103 = vmatmul.mubr.bf16.gmra.mrb[0].mxu0 %v68
    %v104 = vpop.f32.mrb[0].mxu0
    %v105 = vadd.f32 %v52, %v104
    %v106 = vpop.f32.mrb[0].mxu0
    %v107 = vpop.f32.mrb[0].mxu0
    %v108 = vpop.f32.mrb[0].mxu0
    %109 = vdwg.mxu0
    %s110 = smul.u32 0, 128
    %s111 = sshra.s32 %s110, 7
    %s112 = sand.u32 %s110, 127
    %s113 = scalar_lea.vmem [#allocation7], %s111
    %114 = vst [vmem:[%s113] sm:$0xff] %v105
    %p115 = scmp.eq.s32.totalorder 0, 0
    // Predicated region
    $region22: #{tpu_custom_call.1} parent=1 // pred_check
      %p116 = pneg %p115
    $region23: #{tpu_custom_call.1} parent=1 // pred_check_branch
      %118 = sbr.rel (%p116) target = $region25
    $region24: #{tpu_custom_call.1} parent=1 // pred_region
      %v119 = vld [vmem:[#allocation7] sm:$0xff]
      %120 = vmax.xlane.f32.xlu0 %v119
      %v121 = vpop.xlane.xlu0 %120
      %v122 = vsub.f32 %v119, %v121
      %v123 = vmul.f32 %v122, 1.442695
      %v124 = vpow.pop %v123
      %125 = vadd.xlane.f32.xlu0 %v124
      %v126 = vpop.xlane.xlu0 %125
      %v127 = vrcp.pop %v126
      %v128 = vmul.f32 %v124, %v127
      %129 = vst [vmem:[#allocation7] sm:$0xff] %v128
    $region25: #{tpu_custom_call.1} parent=1 // pred_fallthru
      _
    // Predicated region
    $region26: #{tpu_custom_call.1} parent=1 // pred_check
      _
    $region27: #{tpu_custom_call.1} parent=1 // pred_check_branch
      %131 = sbr.rel (0) target = $region29
    $region28: #{tpu_custom_call.1} parent=1 // pred_region
      %s133 = ssub.s32 128, 128
      %134 = vsyncadd [#allocation4], %s133
      %s136 = sshll.u32 [#allocation7], 4
      %s137 = int_to_ptr.vmem [resolvable:$true] %s136
      %139 = dma.vmem_to_hbm [thread:$0]  %s137, 128, %s3, [#allocation4]
    $region29: #{tpu_custom_call.1} parent=1 // pred_fallthru
      _
    // Predicated region
    $region30: #{tpu_custom_call.1} parent=1 // pred_check
      _
    $region31: #{tpu_custom_call.1} parent=1 // pred_check_branch
      %141 = sbr.rel (0) target = $region33
    $region32: #{tpu_custom_call.1} parent=1 // pred_region
      %142 = dma.done [#allocation4], 128
    $region33: #{tpu_custom_call.1} parent=1 // pred_fallthru
      _
    %143 = vsyncpa [#allocation3], 1
    %144 = vsyncpa [#allocation6], 1
    %145 = vsyncpa [#allocation4], 1

</llo_original>
